<compile_context>
chip_gen: v7x
topology: tpu7x:2x2x1
jax: 0.10.0
libtpu: 0.0.40
codegen_flags: <defaults>
</compile_context>

<pallas_src>
import numpy as np
import jax
import jax.numpy as jnp
from jax import lax
from jax.experimental import pallas as pl
from jax.experimental.pallas import tpu as pltpu


# ----------------------------------------------------------------------------
# small helpers
# ----------------------------------------------------------------------------
def _round_up(a, b):
    return ((a + b - 1) // b) * b


def _i32(c):
    """Wrap an unsigned 32-bit constant into a Python int representable as int32."""
    c = c & 0xFFFFFFFF
    if c >= (1 << 31):
        c -= (1 << 32)
    return c


_GOLD = _i32(0x9E3779B9)
_M1 = _i32(0x7FEB352D)
_M2 = _i32(0x846CA68B)


def _shr(x, s):
    """Logical right shift of int32 (arithmetic shift + mask of the sign-extended bits)."""
    return jnp.bitwise_and(jnp.right_shift(x, s), (1 << (32 - s)) - 1)


def _hash32(x):
    """splitmix/lowbias32-style 32-bit finalizer (int32, wrapping multiplies)."""
    x = x ^ _shr(x, 16)
    x = x * _M1
    x = x ^ _shr(x, 15)
    x = x * _M2
    x = x ^ _shr(x, 16)
    return x


# ----------------------------------------------------------------------------
# Standard-normal inverse CDF (Acklam), branchless: only log/sqrt/where/FMA/div.
# ----------------------------------------------------------------------------
_A = (-3.969683028665376e+01, 2.209460984245205e+02, -2.759285104469687e+02,
      1.383577518672690e+02, -3.066479806614716e+01, 2.506628277459239e+00)
_B = (-5.447609879822406e+01, 1.615858368580409e+02, -1.556989798598866e+02,
      6.680131188771972e+01, -1.328068155288572e+01)
_C = (-7.784894002430293e-03, -3.223964580411365e-01, -2.400758277161838e+00,
      -2.549732539343734e+00, 4.374664141464968e+00, 2.938163982698783e+00)
_D = (7.784695709041462e-03, 3.224671290700398e-01, 2.445134137142996e+00,
      3.754408661907416e+00)
_P_LOW = 0.02425


def _norm_icdf(p):
    """Branchless Acklam approximation of Phi^{-1}(p), p strictly inside (0, 1)."""
    # central region
    q = p - 0.5
    r = q * q
    num = ((((_A[0] * r + _A[1]) * r + _A[2]) * r + _A[3]) * r + _A[4]) * r + _A[5]
    den = ((((_B[0] * r + _B[1]) * r + _B[2]) * r + _B[3]) * r + _B[4]) * r + 1.0
    x_central = num * q / den
    # tails: evaluate on min(p, 1-p), flip sign for the upper tail
    pt = jnp.minimum(p, 1.0 - p)
    s = jnp.sqrt(-2.0 * jnp.log(pt))
    num_t = ((((_C[0] * s + _C[1]) * s + _C[2]) * s + _C[3]) * s + _C[4]) * s + _C[5]
    den_t = (((_D[0] * s + _D[1]) * s + _D[2]) * s + _D[3]) * s + 1.0
    x_tail = num_t / den_t
    x_tail = jnp.where(p < 0.5, x_tail, -x_tail)
    return jnp.where(pt < _P_LOW, x_tail, x_central)


# ----------------------------------------------------------------------------
# Gaussian_Noise: multiplicative noise x * N(1, std = p/(1-p))
# ----------------------------------------------------------------------------
_LANES = 512            # lane-dense, 128-aligned last dim -> unmasked vector stores
_MAX_BLOCK_ROWS = 512   # 512 x 512 f32 = 1 MiB per block (safe with double buffering on v5e/v6e/v7x)


def _make_noise_kernel(std, block_rows, lanes):
    inv23 = 1.0 / float(1 << 23)

    def kernel(seed_ref, x_ref, o_ref):
        # Per-tile-unique counters: tile i owns counters [i*block_rows*lanes, (i+1)*...),
        # so every grid step draws independent noise.
        i = pl.program_id(0)
        base = i * (block_rows * lanes)
        row = lax.broadcasted_iota(jnp.int32, (block_rows, lanes), 0)
        col = lax.broadcasted_iota(jnp.int32, (block_rows, lanes), 1)
        ctr = base + row * lanes + col
        h = _hash32(ctr ^ (seed_ref[0] * _GOLD))
        # 23 uniform bits -> u strictly inside (0, 1); inverse-CDF -> exact-ish N(0,1)
        u = (_shr(h, 9).astype(jnp.float32) + 0.5) * inv23
        z = _norm_icdf(u)
        noise = 1.0 + std * z
        o_ref[...] = (x_ref[...].astype(jnp.float32) * noise).astype(o_ref.dtype)

    return kernel


def gaussian_noise(x, p_rate, *, seed=0, training=True):
    """Forward of Gaussian_Noise: identity in eval mode, else x * N(1, std=p/(1-p)).

    std = p/(1-p) is the standard deviation (matches torch.normal(mean, std) in the module).
    """
    assert 0.0 <= p_rate < 1.0
    if (not training) or p_rate <= 0.0:
        return x
    std = float(p_rate / (1.0 - p_rate))

    orig_shape, orig_dtype = x.shape, x.dtype
    total = int(x.size)

    # Lane-dense layout: flatten and reshape to (rows, 512) so stores are unmasked and
    # (8,128)-tiled regardless of H*W; pad the tail in the wrapper.
    rows = pl.cdiv(total, _LANES)
    block_rows = min(_MAX_BLOCK_ROWS, _round_up(rows, 8))
    rows_p = _round_up(rows, block_rows)
    pad = rows_p * _LANES - total

    xf = x.reshape(-1)
    if pad:
        xf = jnp.pad(xf, (0, pad))
    x2 = xf.reshape(rows_p, _LANES)
    grid = rows_p // block_rows

    kernel = _make_noise_kernel(std, block_rows, _LANES)
    seed_arr = jnp.asarray([seed], dtype=jnp.int32)

    out2 = pl.pallas_call(
        kernel,
        out_shape=jax.ShapeDtypeStruct((rows_p, _LANES), orig_dtype),
        grid_spec=pltpu.PrefetchScalarGridSpec(
            num_scalar_prefetch=1,                  # seed lands in SMEM
            grid=(grid,),
            in_specs=[pl.BlockSpec((block_rows, _LANES), lambda i, s: (i, 0))],
            out_specs=pl.BlockSpec((block_rows, _LANES), lambda i, s: (i, 0)),
        ),
        compiler_params=pltpu.CompilerParams(
            dimension_semantics=("parallel",)),     # independent tiles -> megacore sharding
    )(seed_arr, x2)

    return out2.reshape(-1)[:total].reshape(orig_shape)


# ----------------------------------------------------------------------------
# Bilinear 2x upsample (align_corners=False), as separable interpolation matmuls
# ----------------------------------------------------------------------------
def _bilinear_matrix(n_in, n_out):
    """Interpolation matrix A (n_out, n_in) so that out = A @ in, matching
    torch F.interpolate(mode='bilinear', align_corners=False) with edge clamping."""
    o = np.arange(n_out, dtype=np.float64)
    c = (o + 0.5) * (n_in / n_out) - 0.5
    c0 = np.floor(c)
    frac = c - c0
    i0 = np.clip(c0, 0, n_in - 1).astype(np.int64)
    i1 = np.clip(c0 + 1, 0, n_in - 1).astype(np.int64)
    A = np.zeros((n_out, n_in), dtype=np.float32)
    A[np.arange(n_out), i0] += (1.0 - frac).astype(np.float32)
    A[np.arange(n_out), i1] += frac.astype(np.float32)
    return A


def _upsample_kernel(x_ref, ah_ref, awt_ref, o_ref):
    tb, h, w = x_ref.shape
    w2 = awt_ref.shape[1]
    # W-interp: one big 2-D MXU matmul over the whole (tb*h, w) slab.
    xb = x_ref[...].astype(jnp.float32).reshape(tb * h, w)
    t = jnp.dot(xb, awt_ref[...], preferred_element_type=jnp.float32)   # (tb*h, w2)
    t = t.reshape(tb, h, w2)
    ah = ah_ref[...]                                                    # (h2, h)
    # H-interp: short statically-unrolled loop of 2-D matmuls (tb <= 8).
    for b in range(tb):
        o_ref[b] = jnp.dot(ah, t[b], preferred_element_type=jnp.float32).astype(o_ref.dtype)


def bilinear_upsample_2x(x):
    """NCHW bilinear 2x upsample (F.interpolate(scale_factor=2, mode='bilinear'))."""
    n, c, h, w = x.shape
    h2, w2 = 2 * h, 2 * w
    ah = jnp.asarray(_bilinear_matrix(h, h2))            # (h2, h)
    awt = jnp.asarray(_bilinear_matrix(w, w2).T)         # (w, w2)
    nc = n * c
    tb = min(nc, 8)
    nc_p = _round_up(nc, tb)
    x3 = x.reshape(nc, h, w)
    if nc_p != nc:
        x3 = jnp.pad(x3, ((0, nc_p - nc), (0, 0), (0, 0)))
    grid = nc_p // tb
    out3 = pl.pallas_call(
        _upsample_kernel,
        out_shape=jax.ShapeDtypeStruct((nc_p, h2, w2), x.dtype),
        grid=(grid,),
        in_specs=[
            pl.BlockSpec((tb, h, w), lambda i: (i, 0, 0)),
            pl.BlockSpec((h2, h), lambda i: (0, 0)),
            pl.BlockSpec((w, w2), lambda i: (0, 0)),
        ],
        out_specs=pl.BlockSpec((tb, h2, w2), lambda i: (i, 0, 0)),
        compiler_params=pltpu.CompilerParams(dimension_semantics=("parallel",)),
    )(x3, ah, awt)
    return out3[:nc].reshape(n, c, h2, w2)


# ----------------------------------------------------------------------------
# Fused Conv2d(3x3, stride 1, pad 1, bias=False) -> BatchNorm (folded) -> ReLU
# ----------------------------------------------------------------------------
def _make_conv3x3_bn_relu_kernel(h, w):
    def kernel(xp_ref, w_ref, scale_ref, bias_ref, o_ref):
        cin = xp_ref.shape[3]
        cout = o_ref.shape[2]
        acc = jnp.zeros((h * w, cout), jnp.float32)
        for dy in range(3):                              # 9 static taps, unrolled
            for dx in range(3):
                xs = xp_ref[0, dy:dy + h, dx:dx + w, :].astype(jnp.float32)   # (h, w, cin)
                acc = acc + jnp.dot(xs.reshape(h * w, cin),
                                    w_ref[dy, dx].astype(jnp.float32),
                                    preferred_element_type=jnp.float32)
        y = acc * scale_ref[...] + bias_ref[...]          # folded BatchNorm scale/shift
        o_ref[0] = jnp.maximum(y, 0.0).astype(o_ref.dtype)  # ReLU
    return kernel


def conv3x3_bn_relu(x, weight, gamma, beta, mean, var, *, eps=1e-5):
    """x: NCHW, weight: (Cout, Cin, 3, 3). BN applied as per-channel scale/shift."""
    # TODO(synk): training-mode BatchNorm (batch statistics) would need an extra reduction
    # pass; BN here uses the folded running-stats (inference) form.
    # TODO(synk): very large spatial sizes would need row-tiling with halos; whole-image
    # blocks are used here (fits VMEM comfortably at these decoder sizes).
    n, cin, h, w = x.shape
    cout = weight.shape[0]
    x_nhwc = jnp.transpose(x, (0, 2, 3, 1))
    xp = jnp.pad(x_nhwc, ((0, 0), (1, 1), (1, 1), (0, 0)))
    w_hwio = jnp.transpose(weight, (2, 3, 1, 0)).astype(jnp.float32)
    scale = (gamma / jnp.sqrt(var + eps)).astype(jnp.float32)
    bias = (beta - mean * scale).astype(jnp.float32)

    out = pl.pallas_call(
        _make_conv3x3_bn_relu_kernel(h, w),
        out_shape=jax.ShapeDtypeStruct((n, h * w, cout), x.dtype),
        grid=(n,),
        in_specs=[
            pl.BlockSpec((1, h + 2, w + 2, cin), lambda i: (i, 0, 0, 0)),
            pl.BlockSpec((3, 3, cin, cout), lambda i: (0, 0, 0, 0)),
            pl.BlockSpec((1, cout), lambda i: (0, 0)),
            pl.BlockSpec((1, cout), lambda i: (0, 0)),
        ],
        out_specs=pl.BlockSpec((1, h * w, cout), lambda i: (i, 0, 0)),
        compiler_params=pltpu.CompilerParams(dimension_semantics=("parallel",)),
    )(xp, w_hwio, scale.reshape(1, cout), bias.reshape(1, cout))
    return jnp.transpose(out.reshape(n, h, w, cout), (0, 3, 1, 2))


# ----------------------------------------------------------------------------
# UpsampleBlock forward (non-parametric path)
# ----------------------------------------------------------------------------
def upsample_block_forward(x, skip, params, *, p_rate=0.5, training=True, seed=0):
    """bilinear up 2x -> concat(skip) -> Gaussian_Noise -> conv1+bn1+relu -> conv2+bn2+relu."""
    # TODO(synk): parametric=True branch (ConvTranspose2d 4x4/stride-2 upsampling) not implemented.
    x = bilinear_upsample_2x(x)
    if skip is not None:
        x = jnp.concatenate([x, skip], axis=1)   # channel concat: pure layout, left to XLA
        x = gaussian_noise(x, p_rate, seed=seed, training=training)
    x = conv3x3_bn_relu(x, params["w1"], params["g1"], params["b1"], params["m1"], params["v1"])
    x = conv3x3_bn_relu(x, params["w2"], params["g2"], params["b2"], params["m2"], params["v2"])
    return x


def _reference_forward_eval(x, skip, params, *, eps=1e-5):
    """Pure-JAX reference of the eval-mode forward (no noise) for correctness checking."""
    n, c, h, w = x.shape
    ah = jnp.asarray(_bilinear_matrix(h, 2 * h))
    aw = jnp.asarray(_bilinear_matrix(w, 2 * w))
    x_up = jnp.einsum("oh,nchw,pw->ncop", ah, x, aw)
    z = jnp.concatenate([x_up, skip], axis=1)

    def conv_bn_relu(z, wgt, g, b, m, v):
        zn = jnp.transpose(z, (0, 2, 3, 1))
        wk = jnp.transpose(wgt, (2, 3, 1, 0))
        y = lax.conv_general_dilated(zn, wk, (1, 1), "SAME",
                                     dimension_numbers=("NHWC", "HWIO", "NHWC"))
        s = g / jnp.sqrt(v + eps)
        y = y * s + (b - m * s)
        return jnp.transpose(jnp.maximum(y, 0.0), (0, 3, 1, 2))

    z = conv_bn_relu(z, params["w1"], params["g1"], params["b1"], params["m1"], params["v1"])
    z = conv_bn_relu(z, params["w2"], params["g2"], params["b2"], params["m2"], params["v2"])
    return z


if __name__ == "__main__":
    key = jax.random.PRNGKey(0)
    k = jax.random.split(key, 8)

    N, CH_IN, H, W = 2, 4, 16, 16
    CH_OUT, SKIP_CH = 4, 4
    CIN1 = CH_IN + SKIP_CH

    x = jax.random.normal(k[0], (N, CH_IN, H, W), jnp.float32)
    skip = jax.random.normal(k[1], (N, SKIP_CH, 2 * H, 2 * W), jnp.float32)

    params = {
        "w1": 0.1 * jax.random.normal(k[2], (CH_OUT, CIN1, 3, 3), jnp.float32),
        "g1": 1.0 + 0.1 * jax.random.normal(k[3], (CH_OUT,), jnp.float32),
        "b1": 0.1 * jax.random.normal(k[4], (CH_OUT,), jnp.float32),
        "m1": jnp.zeros((CH_OUT,), jnp.float32),
        "v1": jnp.ones((CH_OUT,), jnp.float32),
        "w2": 0.1 * jax.random.normal(k[5], (CH_OUT, CH_OUT, 3, 3), jnp.float32),
        "g2": 1.0 + 0.1 * jax.random.normal(k[6], (CH_OUT,), jnp.float32),
        "b2": 0.1 * jax.random.normal(k[7], (CH_OUT,), jnp.float32),
        "m2": jnp.zeros((CH_OUT,), jnp.float32),
        "v2": jnp.ones((CH_OUT,), jnp.float32),
    }

    # Training-mode forward (Gaussian noise dropout active, p=0.5 like the module).
    y_train = jax.block_until_ready(
        upsample_block_forward(x, skip, params, p_rate=0.5, training=True, seed=42))
    assert y_train.shape == (N, CH_OUT, 2 * H, 2 * W) and y_train.dtype == jnp.float32
    assert bool(jnp.all(jnp.isfinite(y_train)))
    assert bool(jnp.all(y_train >= 0.0))          # ReLU output

    # Eval-mode forward (no noise) must match a pure-JAX reference.
    y_eval = jax.block_until_ready(
        upsample_block_forward(x, skip, params, p_rate=0.5, training=False))
    y_ref = jax.block_until_ready(_reference_forward_eval(x, skip, params))
    assert bool(jnp.allclose(y_eval, y_ref, rtol=2e-2, atol=2e-2)), (
        float(jnp.max(jnp.abs(y_eval - y_ref))))

    # Noise kernel sanity: multiplying ones yields noise with mean ~1 and std ~ p/(1-p) = 1.
    ones = jnp.ones((4, 8, 32, 32), jnp.float32)
    noise = jax.block_until_ready(gaussian_noise(ones, 0.5, seed=7, training=True))
    assert abs(float(noise.mean()) - 1.0) < 0.08
    assert abs(float(noise.std()) - 1.0) < 0.08
    assert bool(jnp.allclose(gaussian_noise(x, 0.5, training=False), x))

    print("KERNEL_OK")
</pallas_src>

<mosaic_0001>
module attributes {stable_mosaic.version = 11 : i64} {
  func.func @_upsample_kernel(%arg0: i32, %arg1: memref<8x16x16xf32, #tpu.memory_space<vmem>>, %arg2: memref<32x16xf32, #tpu.memory_space<vmem>>, %arg3: memref<16x32xf32, #tpu.memory_space<vmem>>, %arg4: memref<8x32x32xf32, #tpu.memory_space<vmem>>) attributes {dimension_semantics = [#tpu.dimension_semantics<parallel>], iteration_bounds = array<i64: 1>, scalar_prefetch = 0 : i64, scratch_operands = 0 : i64, tpu.core_type = #tpu.core_type<tc>, window_params = [{transform_indices = @transform_0, window_bounds = array<i64: 8, 16, 16>}, {pipeline_mode = #tpu.pipeline_mode<synchronous>, transform_indices = @transform_1, window_bounds = array<i64: 32, 16>}, {pipeline_mode = #tpu.pipeline_mode<synchronous>, transform_indices = @transform_2, window_bounds = array<i64: 16, 32>}, {transform_indices = @transform_3, window_bounds = array<i64: 8, 32, 32>}]} {
    %c0 = arith.constant 0 : index
    %c0_0 = arith.constant 0 : index
    %c0_1 = arith.constant 0 : index
    %0 = vector.load %arg1[%c0, %c0_0, %c0_1] : memref<8x16x16xf32, #tpu.memory_space<vmem>>, vector<8x16x16xf32>
    %1 = vector.shape_cast %0 : vector<8x16x16xf32> to vector<128x16xf32>
    %c0_2 = arith.constant 0 : index
    %c0_3 = arith.constant 0 : index
    %2 = vector.load %arg3[%c0_2, %c0_3] : memref<16x32xf32, #tpu.memory_space<vmem>>, vector<16x32xf32>
    %cst = arith.constant dense<0.000000e+00> : vector<128x32xf32>
    %3 = tpu.matmul %1, %2, %cst {dimension_numbers = #tpu.dot_dimension_numbers<[1], [0], [0], [1], [0, 0, 1, 1], [], []>} : vector<128x16xf32>, vector<16x32xf32>, vector<128x32xf32> -> vector<128x32xf32>
    %4 = vector.shape_cast %3 : vector<128x32xf32> to vector<8x16x32xf32>
    %c0_4 = arith.constant 0 : index
    %c0_5 = arith.constant 0 : index
    %5 = vector.load %arg2[%c0_4, %c0_5] : memref<32x16xf32, #tpu.memory_space<vmem>>, vector<32x16xf32>
    %6 = vector.extract_strided_slice %4 {offsets = [0, 0, 0], sizes = [1, 16, 32], strides = [1, 1, 1]} : vector<8x16x32xf32> to vector<1x16x32xf32>
    %7 = vector.shape_cast %6 : vector<1x16x32xf32> to vector<16x32xf32>
    %cst_6 = arith.constant dense<0.000000e+00> : vector<32x32xf32>
    %8 = tpu.matmul %5, %7, %cst_6 {dimension_numbers = #tpu.dot_dimension_numbers<[1], [0], [0], [1], [0, 0, 1, 1], [], []>} : vector<32x16xf32>, vector<16x32xf32>, vector<32x32xf32> -> vector<32x32xf32>
    %c0_7 = arith.constant 0 : index
    %c0_8 = arith.constant 0 : index
    %c0_9 = arith.constant 0 : index
    %9 = vector.load %arg4[%c0_7, %c0_8, %c0_9] : memref<8x32x32xf32, #tpu.memory_space<vmem>>, vector<1x32x32xf32>
    %10 = vector.shape_cast %9 : vector<1x32x32xf32> to vector<32x32xf32>
    %11 = vector.shape_cast %8 : vector<32x32xf32> to vector<1x32x32xf32>
    tpu.vector_store %arg4[%c0_7, %c0_8, %c0_9], %11 {strides = array<i32>} : memref<8x32x32xf32, #tpu.memory_space<vmem>>, vector<1x32x32xf32>,
    %12 = vector.extract_strided_slice %4 {offsets = [1, 0, 0], sizes = [1, 16, 32], strides = [1, 1, 1]} : vector<8x16x32xf32> to vector<1x16x32xf32>
    %13 = vector.shape_cast %12 : vector<1x16x32xf32> to vector<16x32xf32>
    %cst_10 = arith.constant dense<0.000000e+00> : vector<32x32xf32>
    %14 = tpu.matmul %5, %13, %cst_10 {dimension_numbers = #tpu.dot_dimension_numbers<[1], [0], [0], [1], [0, 0, 1, 1], [], []>} : vector<32x16xf32>, vector<16x32xf32>, vector<32x32xf32> -> vector<32x32xf32>
    %c1 = arith.constant 1 : index
    %c0_11 = arith.constant 0 : index
    %c0_12 = arith.constant 0 : index
    %15 = vector.load %arg4[%c1, %c0_11, %c0_12] : memref<8x32x32xf32, #tpu.memory_space<vmem>>, vector<1x32x32xf32>
    %16 = vector.shape_cast %15 : vector<1x32x32xf32> to vector<32x32xf32>
    %17 = vector.shape_cast %14 : vector<32x32xf32> to vector<1x32x32xf32>
    tpu.vector_store %arg4[%c1, %c0_11, %c0_12], %17 {strides = array<i32>} : memref<8x32x32xf32, #tpu.memory_space<vmem>>, vector<1x32x32xf32>,
    %18 = vector.extract_strided_slice %4 {offsets = [2, 0, 0], sizes = [1, 16, 32], strides = [1, 1, 1]} : vector<8x16x32xf32> to vector<1x16x32xf32>
    %19 = vector.shape_cast %18 : vector<1x16x32xf32> to vector<16x32xf32>
    %cst_13 = arith.constant dense<0.000000e+00> : vector<32x32xf32>
    %20 = tpu.matmul %5, %19, %cst_13 {dimension_numbers = #tpu.dot_dimension_numbers<[1], [0], [0], [1], [0, 0, 1, 1], [], []>} : vector<32x16xf32>, vector<16x32xf32>, vector<32x32xf32> -> vector<32x32xf32>
    %c2 = arith.constant 2 : index
    %c0_14 = arith.constant 0 : index
    %c0_15 = arith.constant 0 : index
    %21 = vector.load %arg4[%c2, %c0_14, %c0_15] : memref<8x32x32xf32, #tpu.memory_space<vmem>>, vector<1x32x32xf32>
    %22 = vector.shape_cast %21 : vector<1x32x32xf32> to vector<32x32xf32>
    %23 = vector.shape_cast %20 : vector<32x32xf32> to vector<1x32x32xf32>
    tpu.vector_store %arg4[%c2, %c0_14, %c0_15], %23 {strides = array<i32>} : memref<8x32x32xf32, #tpu.memory_space<vmem>>, vector<1x32x32xf32>,
    %24 = vector.extract_strided_slice %4 {offsets = [3, 0, 0], sizes = [1, 16, 32], strides = [1, 1, 1]} : vector<8x16x32xf32> to vector<1x16x32xf32>
    %25 = vector.shape_cast %24 : vector<1x16x32xf32> to vector<16x32xf32>
    %cst_16 = arith.constant dense<0.000000e+00> : vector<32x32xf32>
    %26 = tpu.matmul %5, %25, %cst_16 {dimension_numbers = #tpu.dot_dimension_numbers<[1], [0], [0], [1], [0, 0, 1, 1], [], []>} : vector<32x16xf32>, vector<16x32xf32>, vector<32x32xf32> -> vector<32x32xf32>
    %c3 = arith.constant 3 : index
    %c0_17 = arith.constant 0 : index
    %c0_18 = arith.constant 0 : index
    %27 = vector.load %arg4[%c3, %c0_17, %c0_18] : memref<8x32x32xf32, #tpu.memory_space<vmem>>, vector<1x32x32xf32>
    %28 = vector.shape_cast %27 : vector<1x32x32xf32> to vector<32x32xf32>
    %29 = vector.shape_cast %26 : vector<32x32xf32> to vector<1x32x32xf32>
    tpu.vector_store %arg4[%c3, %c0_17, %c0_18], %29 {strides = array<i32>} : memref<8x32x32xf32, #tpu.memory_space<vmem>>, vector<1x32x32xf32>,
    %30 = vector.extract_strided_slice %4 {offsets = [4, 0, 0], sizes = [1, 16, 32], strides = [1, 1, 1]} : vector<8x16x32xf32> to vector<1x16x32xf32>
    %31 = vector.shape_cast %30 : vector<1x16x32xf32> to vector<16x32xf32>
    %cst_19 = arith.constant dense<0.000000e+00> : vector<32x32xf32>
    %32 = tpu.matmul %5, %31, %cst_19 {dimension_numbers = #tpu.dot_dimension_numbers<[1], [0], [0], [1], [0, 0, 1, 1], [], []>} : vector<32x16xf32>, vector<16x32xf32>, vector<32x32xf32> -> vector<32x32xf32>
    %c4 = arith.constant 4 : index
    %c0_20 = arith.constant 0 : index
    %c0_21 = arith.constant 0 : index
    %33 = vector.load %arg4[%c4, %c0_20, %c0_21] : memref<8x32x32xf32, #tpu.memory_space<vmem>>, vector<1x32x32xf32>
    %34 = vector.shape_cast %33 : vector<1x32x32xf32> to vector<32x32xf32>
    %35 = vector.shape_cast %32 : vector<32x32xf32> to vector<1x32x32xf32>
    tpu.vector_store %arg4[%c4, %c0_20, %c0_21], %35 {strides = array<i32>} : memref<8x32x32xf32, #tpu.memory_space<vmem>>, vector<1x32x32xf32>,
    %36 = vector.extract_strided_slice %4 {offsets = [5, 0, 0], sizes = [1, 16, 32], strides = [1, 1, 1]} : vector<8x16x32xf32> to vector<1x16x32xf32>
    %37 = vector.shape_cast %36 : vector<1x16x32xf32> to vector<16x32xf32>
    %cst_22 = arith.constant dense<0.000000e+00> : vector<32x32xf32>
    %38 = tpu.matmul %5, %37, %cst_22 {dimension_numbers = #tpu.dot_dimension_numbers<[1], [0], [0], [1], [0, 0, 1, 1], [], []>} : vector<32x16xf32>, vector<16x32xf32>, vector<32x32xf32> -> vector<32x32xf32>
    %c5 = arith.constant 5 : index
    %c0_23 = arith.constant 0 : index
    %c0_24 = arith.constant 0 : index
    %39 = vector.load %arg4[%c5, %c0_23, %c0_24] : memref<8x32x32xf32, #tpu.memory_space<vmem>>, vector<1x32x32xf32>
    %40 = vector.shape_cast %39 : vector<1x32x32xf32> to vector<32x32xf32>
    %41 = vector.shape_cast %38 : vector<32x32xf32> to vector<1x32x32xf32>
    tpu.vector_store %arg4[%c5, %c0_23, %c0_24], %41 {strides = array<i32>} : memref<8x32x32xf32, #tpu.memory_space<vmem>>, vector<1x32x32xf32>,
    %42 = vector.extract_strided_slice %4 {offsets = [6, 0, 0], sizes = [1, 16, 32], strides = [1, 1, 1]} : vector<8x16x32xf32> to vector<1x16x32xf32>
    %43 = vector.shape_cast %42 : vector<1x16x32xf32> to vector<16x32xf32>
    %cst_25 = arith.constant dense<0.000000e+00> : vector<32x32xf32>
    %44 = tpu.matmul %5, %43, %cst_25 {dimension_numbers = #tpu.dot_dimension_numbers<[1], [0], [0], [1], [0, 0, 1, 1], [], []>} : vector<32x16xf32>, vector<16x32xf32>, vector<32x32xf32> -> vector<32x32xf32>
    %c6 = arith.constant 6 : index
    %c0_26 = arith.constant 0 : index
    %c0_27 = arith.constant 0 : index
    %45 = vector.load %arg4[%c6, %c0_26, %c0_27] : memref<8x32x32xf32, #tpu.memory_space<vmem>>, vector<1x32x32xf32>
    %46 = vector.shape_cast %45 : vector<1x32x32xf32> to vector<32x32xf32>
    %47 = vector.shape_cast %44 : vector<32x32xf32> to vector<1x32x32xf32>
    tpu.vector_store %arg4[%c6, %c0_26, %c0_27], %47 {strides = array<i32>} : memref<8x32x32xf32, #tpu.memory_space<vmem>>, vector<1x32x32xf32>,
    %48 = vector.extract_strided_slice %4 {offsets = [7, 0, 0], sizes = [1, 16, 32], strides = [1, 1, 1]} : vector<8x16x32xf32> to vector<1x16x32xf32>
    %49 = vector.shape_cast %48 : vector<1x16x32xf32> to vector<16x32xf32>
    %cst_28 = arith.constant dense<0.000000e+00> : vector<32x32xf32>
    %50 = tpu.matmul %5, %49, %cst_28 {dimension_numbers = #tpu.dot_dimension_numbers<[1], [0], [0], [1], [0, 0, 1, 1], [], []>} : vector<32x16xf32>, vector<16x32xf32>, vector<32x32xf32> -> vector<32x32xf32>
    %c7 = arith.constant 7 : index
    %c0_29 = arith.constant 0 : index
    %c0_30 = arith.constant 0 : index
    %51 = vector.load %arg4[%c7, %c0_29, %c0_30] : memref<8x32x32xf32, #tpu.memory_space<vmem>>, vector<1x32x32xf32>
    %52 = vector.shape_cast %51 : vector<1x32x32xf32> to vector<32x32xf32>
    %53 = vector.shape_cast %50 : vector<32x32xf32> to vector<1x32x32xf32>
    tpu.vector_store %arg4[%c7, %c0_29, %c0_30], %53 {strides = array<i32>} : memref<8x32x32xf32, #tpu.memory_space<vmem>>, vector<1x32x32xf32>,
    return
  }
  func.func @transform_0(%arg0: i32) -> (i32, i32, i32) {
    %c0_i32 = arith.constant 0 : i32
    %c0_i32_0 = arith.constant 0 : i32
    %c0_i32_1 = arith.constant 0 : i32
    return %arg0, %c0_i32, %c0_i32_0 : i32, i32, i32
  }
  func.func @transform_1(%arg0: i32) -> (i32, i32) {
    %c0_i32 = arith.constant 0 : i32
    %c0_i32_0 = arith.constant 0 : i32
    %c0_i32_1 = arith.constant 0 : i32
    return %c0_i32, %c0_i32_0 : i32, i32
  }
  func.func @transform_2(%arg0: i32) -> (i32, i32) {
    %c0_i32 = arith.constant 0 : i32
    %c0_i32_0 = arith.constant 0 : i32
    %c0_i32_1 = arith.constant 0 : i32
    return %c0_i32, %c0_i32_0 : i32, i32
  }
  func.func @transform_3(%arg0: i32) -> (i32, i32, i32) {
    %c0_i32 = arith.constant 0 : i32
    %c0_i32_0 = arith.constant 0 : i32
    %c0_i32_1 = arith.constant 0 : i32
    return %arg0, %c0_i32, %c0_i32_0 : i32, i32, i32
  }
}

</mosaic_0001>

<llo_original>
// kernel: tpu_custom_call.1
$region0: #{tpu_custom_call.1}
  #allocation0 [shape = 'u32[]', space=smem, size = 0x4, offset = 0x4, fixed_abs, tag = 'smem constant byte address 0x4 - core index']
  #allocation1 [shape = 'u32[144,128]{1,0:T(1,128)}', space=vmem, size = 0x12000, scoped, tag = 'internal scratch']
  %s0 = inlined_call_operand.hbm [shape: f32[8,16,16], index: 0, kind: input, shape index: {}]
  %s1 = inlined_call_operand.vmem [shape: f32[32,16], index: 1, kind: input, shape index: {}]
  %s2 = inlined_call_operand.vmem [shape: f32[16,32], index: 2, kind: input, shape index: {}]
  %s3 = inlined_call_operand.hbm [shape: f32[8,32,32], index: 3, kind: output, shape index: {}]
  %s4 = sld [smem:[#allocation0]]
  $region26: #{tpu_custom_call.1} parent=0
    _
  %s6 = ssub.s32 1, %s4
  %s7 = scalar_select 0, %s6, %s4
  $region1: #{tpu_custom_call.1} parent=0
    #allocation2 [shape = 'u8[65536]{0}', space=vmem, size = 0x10000, scoped, tag = 'input window, operand 0, single buffered']
    #allocation3 [shape = 's32[1]{0}', space=sflag, size = 0x4, scoped, tag = 'scoped memory for tpu_custom_call.1']
    #allocation4 [shape = 's32[1]{0}', space=sflag, size = 0x4, scoped, tag = 'scoped memory for tpu_custom_call.1']
    #allocation5 [shape = 'u8[131072]{0}', space=vmem, size = 0x20000, scoped, tag = 'output window, operand 0, single buffered']
    %8 = vsyncpa [#allocation3], 0
    %9 = vsyncpa [#allocation4], 0
    // Predicated region
    $region2: #{tpu_custom_call.1} parent=1 // pred_check
      _
    $region3: #{tpu_custom_call.1} parent=1 // pred_check_branch
      %11 = sbr.rel (0) target = $region5
    $region4: #{tpu_custom_call.1} parent=1 // pred_region
      %s13 = ssub.s32 2048, 2048
      %14 = vsyncadd [#allocation3], %s13
      %s15 = sshll.u32 [#allocation2], 4
      %s16 = int_to_ptr.vmem [resolvable:$true] %s15
      %21 = dma.hbm_to_vmem [thread:$0]  %s0, 2048, %s16, [#allocation3], 128, 128, 8
    $region5: #{tpu_custom_call.1} parent=1 // pred_fallthru
      _
    // Predicated region
    $region6: #{tpu_custom_call.1} parent=1 // pred_check
      _
    $region7: #{tpu_custom_call.1} parent=1 // pred_check_branch
      %23 = sbr.rel (0) target = $region9
    $region8: #{tpu_custom_call.1} parent=1 // pred_region
      _
    $region9: #{tpu_custom_call.1} parent=1 // pred_fallthru
      _
    // Predicated region
    $region10: #{tpu_custom_call.1} parent=1 // pred_check
      _
    $region11: #{tpu_custom_call.1} parent=1 // pred_check_branch
      %25 = sbr.rel (0) target = $region13
    $region12: #{tpu_custom_call.1} parent=1 // pred_region
      _
    $region13: #{tpu_custom_call.1} parent=1 // pred_fallthru
      _
    // Predicated region
    $region14: #{tpu_custom_call.1} parent=1 // pred_check
      _
    $region15: #{tpu_custom_call.1} parent=1 // pred_check_branch
      %27 = sbr.rel (0) target = $region17
    $region16: #{tpu_custom_call.1} parent=1 // pred_region
      %28 = dma.done [#allocation3], 2048
    $region17: #{tpu_custom_call.1} parent=1 // pred_fallthru
      _
    %v29 = vld [vmem:[#allocation2] sm:$0xff]
    %v30 = vld [vmem:[#allocation2 + $0x8] sm:$0xff]
    %v31 = vld [vmem:[#allocation2 + $0x10] sm:$0xff]
    %v32 = vld [vmem:[#allocation2 + $0x18] sm:$0xff]
    %v33 = vld [vmem:[#allocation2 + $0x20] sm:$0xff]
    %v34 = vld [vmem:[#allocation2 + $0x28] sm:$0xff]
    %v35 = vld [vmem:[#allocation2 + $0x30] sm:$0xff]
    %v36 = vld [vmem:[#allocation2 + $0x38] sm:$0xff]
    %v37 = vld [vmem:[#allocation2 + $0x40] sm:$0xff]
    %v38 = vld [vmem:[#allocation2 + $0x48] sm:$0xff]
    %v39 = vld [vmem:[#allocation2 + $0x50] sm:$0xff]
    %v40 = vld [vmem:[#allocation2 + $0x58] sm:$0xff]
    %v41 = vld [vmem:[#allocation2 + $0x60] sm:$0xff]
    %v42 = vld [vmem:[#allocation2 + $0x68] sm:$0xff]
    %v43 = vld [vmem:[#allocation2 + $0x70] sm:$0xff]
    %v44 = vld [vmem:[#allocation2 + $0x78] sm:$0xff]
    %v45 = vld [vmem:[%s2] sm:$0xff]
    %v46 = vld [vmem:[%s2 + $0x8] sm:$0xff]
    %vm47 = vcmask 130048
    %v49 = vsel %vm47, %v29, 0
    %v52 = vsel %vm47, %v30, 0
    %v55 = vsel %vm47, %v31, 0
    %v58 = vsel %vm47, %v32, 0
    %v61 = vsel %vm47, %v33, 0
    %v64 = vsel %vm47, %v34, 0
    %v67 = vsel %vm47, %v35, 0
    %v70 = vsel %vm47, %v36, 0
    %v73 = vsel %vm47, %v37, 0
    %v76 = vsel %vm47, %v38, 0
    %v79 = vsel %vm47, %v39, 0
    %v82 = vsel %vm47, %v40, 0
    %v85 = vsel %vm47, %v41, 0
    %v88 = vsel %vm47, %v42, 0
    %v91 = vsel %vm47, %v43, 0
    %v94 = vsel %vm47, %v44, 0
    %96 = vmatprep.subr.mxu0 0.0
    %97 = vmatpush1.msra.mxu0 %v45
    %98 = vmatprep.subr.mxu0 0.0
    %99 = vmatpush1.msra.mxu0 %v46
    %100 = vmatprep.subr.mxu0 0.0
    %101 = vmatpush1.msra.mxu0 0.0
    %102 = vmatprep.subr.mxu0 0.0
    %103 = vmatpush1.msra.mxu0 0.0
    %104 = vmatprep.subr.mxu0 0.0
    %105 = vmatpush1.msra.mxu0 0.0
    %106 = vmatprep.subr.mxu0 0.0
    %107 = vmatpush1.msra.mxu0 0.0
    %108 = vmatprep.subr.mxu0 0.0
    %109 = vmatpush1.msra.mxu0 0.0
    %110 = vmatprep.subr.mxu0 0.0
    %111 = vmatpush1.msra.mxu0 0.0
    %112 = vmatprep.subr.mxu0 0.0
    %113 = vmatpush1.msra.mxu0 0.0
    %114 = vmatprep.subr.mxu0 0.0
    %115 = vmatpush1.msra.mxu0 0.0
    %116 = vmatprep.subr.mxu0 0.0
    %117 = vmatpush1.msra.mxu0 0.0
    %118 = vmatprep.subr.mxu0 0.0
    %119 = vmatpush1.msra.mxu0 0.0
    %120 = vmatprep.subr.mxu0 0.0
    %121 = vmatpush1.msra.mxu0 0.0
    %122 = vmatprep.subr.mxu0 0.0
    %123 = vmatpush1.msra.mxu0 0.0
    %124 = vmatprep.subr.mxu0 0.0
    %125 = vmatpush1.msra.mxu0 0.0
    %126 = vmatprep.subr.mxu0 0.0
    %127 = vmatpush1.msra.mxu0 0.0
    %128 = vmatprep.subr.mxu0 0.0
    %129 = vmatpush1.msra.mxu0 0.0
    %130 = vmatprep.subr.mxu0 0.0
    %131 = vmatpush1.msra.mxu0 0.0
    %132 = vmatprep.subr.mxu0 0.0
    %133 = vmatpush1.msra.mxu0 0.0
    %134 = vmatprep.subr.mxu0 0.0
    %135 = vmatpush1.msra.mxu0 0.0
    %136 = vmatprep.subr.mxu0 0.0
    %137 = vmatpush1.msra.mxu0 0.0
    %138 = vmatprep.subr.mxu0 0.0
    %139 = vmatpush1.msra.mxu0 0.0
    %140 = vmatprep.subr.mxu0 0.0
    %141 = vmatpush1.msra.mxu0 0.0
    %142 = vmatprep.subr.mxu0 0.0
    %143 = vmatpush1.msra.mxu0 0.0
    %144 = vmatprep.subr.mxu0 0.0
    %145 = vmatpush1.msra.mxu0 0.0
    %146 = vmatprep.subr.mxu0 0.0
    %147 = vmatpush1.msra.mxu0 0.0
    %148 = vmatprep.subr.mxu0 0.0
    %149 = vmatpush1.msra.mxu0 0.0
    %150 = vmatprep.subr.mxu0 0.0
    %151 = vmatpush1.msra.mxu0 0.0
    %152 = vmatprep.subr.mxu0 0.0
    %153 = vmatpush1.msra.mxu0 0.0
    %154 = vmatprep.subr.mxu0 0.0
    %155 = vmatpush1.msra.mxu0 0.0
    %156 = vmatprep.subr.mxu0 0.0
    %157 = vmatpush1.msra.mxu0 0.0
    %158 = vmatprep.subr.mxu0 0.0
    %159 = vmatpush1.msra.mxu0 0.0
    %160 = vmatprep.mubr.f32.mxu0 0.0
    %161 = vmatmul.mubr.f32.gmra.mrb[0].mxu0 %v49
    %v162 = vpop.f32.mrb[0].mxu0
    %v163 = vadd.f32 0.0, %v162
    %v164 = vpop.f32.mrb[0].mxu0
    %165 = vmatprep.mubr.f32.mxu0 0.0
    %166 = vmatmul.mubr.f32.gmra.mrb[0].mxu0 %v52
    %v167 = vpop.f32.mrb[0].mxu0
    %v168 = vadd.f32 0.0, %v167
    %v169 = vpop.f32.mrb[0].mxu0
    %170 = vmatprep.mubr.f32.mxu0 0.0
    %171 = vmatmul.mubr.f32.gmra.mrb[0].mxu0 %v55
    %v172 = vpop.f32.mrb[0].mxu0
    %v173 = vadd.f32 0.0, %v172
    %v174 = vpop.f32.mrb[0].mxu0
    %175 = vmatprep.mubr.f32.mxu0 0.0
    %176 = vmatmul.mubr.f32.gmra.mrb[0].mxu0 %v58
    %v177 = vpop.f32.mrb[0].mxu0
    %v178 = vadd.f32 0.0, %v177
    %v179 = vpop.f32.mrb[0].mxu0
    %180 = vmatprep.mubr.f32.mxu0 0.0
    %181 = vmatmul.mubr.f32.gmra.mrb[0].mxu0 %v61
    %v182 = vpop.f32.mrb[0].mxu0
    %v183 = vadd.f32 0.0, %v182
    %v184 = vpop.f32.mrb[0].mxu0
    %185 = vmatprep.mubr.f32.mxu0 0.0
    %186 = vmatmul.mubr.f32.gmra.mrb[0].mxu0 %v64
    %v187 = vpop.f32.mrb[0].mxu0
    %v188 = vadd.f32 0.0, %v187
    %v189 = vpop.f32.mrb[0].mxu0
    %190 = vmatprep.mubr.f32.mxu0 0.0
    %191 = vmatmul.mubr.f32.gmra.mrb[0].mxu0 %v67
    %v192 = vpop.f32.mrb[0].mxu0
    %v193 = vadd.f32 0.0, %v192
    %v194 = vpop.f32.mrb[0].mxu0
    %195 = vmatprep.mubr.f32.mxu0 0.0
    %196 = vmatmul.mubr.f32.gmra.mrb[0].mxu0 %v70
    %v197 = vpop.f32.mrb[0].mxu0
    %v198 = vadd.f32 0.0, %v197
    %v199 = vpop.f32.mrb[0].mxu0
    %200 = vmatprep.mubr.f32.mxu0 0.0
    %201 = vmatmul.mubr.f32.gmra.mrb[0].mxu0 %v73
    %v202 = vpop.f32.mrb[0].mxu0
    %v203 = vadd.f32 0.0, %v202
    %v204 = vpop.f32.mrb[0].mxu0
    %205 = vmatprep.mubr.f32.mxu0 0.0
    %206 = vmatmul.mubr.f32.gmra.mrb[0].mxu0 %v76
    %v207 = vpop.f32.mrb[0].mxu0
    %v208 = vadd.f32 0.0, %v207
    %v209 = vpop.f32.mrb[0].mxu0
    %210 = vmatprep.mubr.f32.mxu0 0.0
    %211 = vmatmul.mubr.f32.gmra.mrb[0].mxu0 %v79
    %v212 = vpop.f32.mrb[0].mxu0
    %v213 = vadd.f32 0.0, %v212
    %v214 = vpop.f32.mrb[0].mxu0
    %215 = vmatprep.mubr.f32.mxu0 0.0
    %216 = vmatmul.mubr.f32.gmra.mrb[0].mxu0 %v82
    %v217 = vpop.f32.mrb[0].mxu0
    %v218 = vadd.f32 0.0, %v217
    %v219 = vpop.f32.mrb[0].mxu0
    %220 = vmatprep.mubr.f32.mxu0 0.0
    %221 = vmatmul.mubr.f32.gmra.mrb[0].mxu0 %v85
    %v222 = vpop.f32.mrb[0].mxu0
    %v223 = vadd.f32 0.0, %v222
    %v224 = vpop.f32.mrb[0].mxu0
    %225 = vmatprep.mubr.f32.mxu0 0.0
    %226 = vmatmul.mubr.f32.gmra.mrb[0].mxu0 %v88
    %v227 = vpop.f32.mrb[0].mxu0
    %v228 = vadd.f32 0.0, %v227
    %v229 = vpop.f32.mrb[0].mxu0
    %230 = vmatprep.mubr.f32.mxu0 0.0
    %231 = vmatmul.mubr.f32.gmra.mrb[0].mxu0 %v91
    %v232 = vpop.f32.mrb[0].mxu0
    %v233 = vadd.f32 0.0, %v232
    %v234 = vpop.f32.mrb[0].mxu0
    %235 = vmatprep.mubr.f32.mxu0 0.0
    %236 = vmatmul.mubr.f32.gmra.mrb[0].mxu0 %v94
    %v237 = vpop.f32.mrb[0].mxu0
    %v238 = vadd.f32 0.0, %v237
    %v239 = vpop.f32.mrb[0].mxu0
    %240 = vdwg.mxu0
    %v241 = vld [vmem:[%s1] sm:$0xff]
    %v242 = vld [vmem:[%s1 + $0x8] sm:$0xff]
    %v243 = vld [vmem:[%s1 + $0x10] sm:$0xff]
    %v244 = vld [vmem:[%s1 + $0x18] sm:$0xff]
    %v246 = vsel %vm47, %v241, 0
    %v249 = vsel %vm47, %v242, 0
    %v252 = vsel %vm47, %v243, 0
    %v255 = vsel %vm47, %v244, 0
    %257 = vmatprep.subr.mxu0 0.0
    %258 = vmatpush1.msra.mxu0 %v163
    %259 = vmatprep.subr.mxu0 0.0
    %260 = vmatpush1.msra.mxu0 %v168
    %261 = vmatprep.subr.mxu0 0.0
    %262 = vmatpush1.msra.mxu0 0.0
    %263 = vmatprep.subr.mxu0 0.0
    %264 = vmatpush1.msra.mxu0 0.0
    %265 = vmatprep.subr.mxu0 0.0
    %266 = vmatpush1.msra.mxu0 0.0
    %267 = vmatprep.subr.mxu0 0.0
    %268 = vmatpush1.msra.mxu0 0.0
    %269 = vmatprep.subr.mxu0 0.0
    %270 = vmatpush1.msra.mxu0 0.0
    %271 = vmatprep.subr.mxu0 0.0
    %272 = vmatpush1.msra.mxu0 0.0
    %273 = vmatprep.subr.mxu0 0.0
    %274 = vmatpush1.msra.mxu0 0.0
    %275 = vmatprep.subr.mxu0 0.0
    %276 = vmatpush1.msra.mxu0 0.0
    %277 = vmatprep.subr.mxu0 0.0
    %278 = vmatpush1.msra.mxu0 0.0
    %279 = vmatprep.subr.mxu0 0.0
    %280 = vmatpush1.msra.mxu0 0.0
    %281 = vmatprep.subr.mxu0 0.0
    %282 = vmatpush1.msra.mxu0 0.0
    %283 = vmatprep.subr.mxu0 0.0
    %284 = vmatpush1.msra.mxu0 0.0
    %285 = vmatprep.subr.mxu0 0.0
    %286 = vmatpush1.msra.mxu0 0.0
    %287 = vmatprep.subr.mxu0 0.0
    %288 = vmatpush1.msra.mxu0 0.0
    %289 = vmatprep.subr.mxu0 0.0
    %290 = vmatpush1.msra.mxu0 0.0
    %291 = vmatprep.subr.mxu0 0.0
    %292 = vmatpush1.msra.mxu0 0.0
    %293 = vmatprep.subr.mxu0 0.0
    %294 = vmatpush1.msra.mxu0 0.0
    %295 = vmatprep.subr.mxu0 0.0
    %296 = vmatpush1.msra.mxu0 0.0
    %297 = vmatprep.subr.mxu0 0.0
    %298 = vmatpush1.msra.mxu0 0.0
    %299 = vmatprep.subr.mxu0 0.0
    %300 = vmatpush1.msra.mxu0 0.0
    %301 = vmatprep.subr.mxu0 0.0
    %302 = vmatpush1.msra.mxu0 0.0
    %303 = vmatprep.subr.mxu0 0.0
    %304 = vmatpush1.msra.mxu0 0.0
    %305 = vmatprep.subr.mxu0 0.0
    %306 = vmatpush1.msra.mxu0 0.0
    %307 = vmatprep.subr.mxu0 0.0
    %308 = vmatpush1.msra.mxu0 0.0
    %309 = vmatprep.subr.mxu0 0.0
    %310 = vmatpush1.msra.mxu0 0.0
    %311 = vmatprep.subr.mxu0 0.0
    %312 = vmatpush1.msra.mxu0 0.0
    %313 = vmatprep.subr.mxu0 0.0
    %314 = vmatpush1.msra.mxu0 0.0
    %315 = vmatprep.subr.mxu0 0.0
    %316 = vmatpush1.msra.mxu0 0.0
    %317 = vmatprep.subr.mxu0 0.0
    %318 = vmatpush1.msra.mxu0 0.0
    %319 = vmatprep.subr.mxu0 0.0
    %320 = vmatpush1.msra.mxu0 0.0
    %321 = vmatprep.mubr.f32.mxu0 0.0
    %322 = vmatmul.mubr.f32.gmra.mrb[0].mxu0 %v246
    %v323 = vpop.f32.mrb[0].mxu0
    %v324 = vadd.f32 0.0, %v323
    %v325 = vpop.f32.mrb[0].mxu0
    %326 = vmatprep.mubr.f32.mxu0 0.0
    %327 = vmatmul.mubr.f32.gmra.mrb[0].mxu0 %v249
    %v328 = vpop.f32.mrb[0].mxu0
    %v329 = vadd.f32 0.0, %v328
    %v330 = vpop.f32.mrb[0].mxu0
    %331 = vmatprep.mubr.f32.mxu0 0.0
    %332 = vmatmul.mubr.f32.gmra.mrb[0].mxu0 %v252
    %v333 = vpop.f32.mrb[0].mxu0
    %v334 = vadd.f32 0.0, %v333
    %v335 = vpop.f32.mrb[0].mxu0
    %336 = vmatprep.mubr.f32.mxu0 0.0
    %337 = vmatmul.mubr.f32.gmra.mrb[0].mxu0 %v255
    %v338 = vpop.f32.mrb[0].mxu0
    %v339 = vadd.f32 0.0, %v338
    %v340 = vpop.f32.mrb[0].mxu0
    %341 = vdwg.mxu0
    %vm342 = vcmask 261120
    %343 = vst.msk [vmem:[#allocation5] sm:$0xff] %vm342, %v324
    %344 = vst.msk [vmem:[#allocation5 + $0x8] sm:$0xff] %vm342, %v329
    %345 = vst.msk [vmem:[#allocation5 + $0x10] sm:$0xff] %vm342, %v334
    %346 = vst.msk [vmem:[#allocation5 + $0x18] sm:$0xff] %vm342, %v339
    %347 = vmatprep.subr.mxu0 0.0
    %348 = vmatpush1.msra.mxu0 %v173
    %349 = vmatprep.subr.mxu0 0.0
    %350 = vmatpush1.msra.mxu0 %v178
    %351 = vmatprep.subr.mxu0 0.0
    %352 = vmatpush1.msra.mxu0 0.0
    %353 = vmatprep.subr.mxu0 0.0
    %354 = vmatpush1.msra.mxu0 0.0
    %355 = vmatprep.subr.mxu0 0.0
    %356 = vmatpush1.msra.mxu0 0.0
    %357 = vmatprep.subr.mxu0 0.0
    %358 = vmatpush1.msra.mxu0 0.0
    %359 = vmatprep.subr.mxu0 0.0
    %360 = vmatpush1.msra.mxu0 0.0
    %361 = vmatprep.subr.mxu0 0.0
    %362 = vmatpush1.msra.mxu0 0.0
    %363 = vmatprep.subr.mxu0 0.0
    %364 = vmatpush1.msra.mxu0 0.0
    %365 = vmatprep.subr.mxu0 0.0
    %366 = vmatpush1.msra.mxu0 0.0
    %367 = vmatprep.subr.mxu0 0.0
    %368 = vmatpush1.msra.mxu0 0.0
    %369 = vmatprep.subr.mxu0 0.0
    %370 = vmatpush1.msra.mxu0 0.0
    %371 = vmatprep.subr.mxu0 0.0
    %372 = vmatpush1.msra.mxu0 0.0
    %373 = vmatprep.subr.mxu0 0.0
    %374 = vmatpush1.msra.mxu0 0.0
    %375 = vmatprep.subr.mxu0 0.0
    %376 = vmatpush1.msra.mxu0 0.0
    %377 = vmatprep.subr.mxu0 0.0
    %378 = vmatpush1.msra.mxu0 0.0
    %379 = vmatprep.subr.mxu0 0.0
    %380 = vmatpush1.msra.mxu0 0.0
    %381 = vmatprep.subr.mxu0 0.0
    %382 = vmatpush1.msra.mxu0 0.0
    %383 = vmatprep.subr.mxu0 0.0
    %384 = vmatpush1.msra.mxu0 0.0
    %385 = vmatprep.subr.mxu0 0.0
    %386 = vmatpush1.msra.mxu0 0.0
    %387 = vmatprep.subr.mxu0 0.0
    %388 = vmatpush1.msra.mxu0 0.0
    %389 = vmatprep.subr.mxu0 0.0
    %390 = vmatpush1.msra.mxu0 0.0
    %391 = vmatprep.subr.mxu0 0.0
    %392 = vmatpush1.msra.mxu0 0.0
    %393 = vmatprep.subr.mxu0 0.0
    %394 = vmatpush1.msra.mxu0 0.0
    %395 = vmatprep.subr.mxu0 0.0
    %396 = vmatpush1.msra.mxu0 0.0
    %397 = vmatprep.subr.mxu0 0.0
    %398 = vmatpush1.msra.mxu0 0.0
    %399 = vmatprep.subr.mxu0 0.0
    %400 = vmatpush1.msra.mxu0 0.0
    %401 = vmatprep.subr.mxu0 0.0
    %402 = vmatpush1.msra.mxu0 0.0
    %403 = vmatprep.subr.mxu0 0.0
    %404 = vmatpush1.msra.mxu0 0.0
    %405 = vmatprep.subr.mxu0 0.0
    %406 = vmatpush1.msra.mxu0 0.0
    %407 = vmatprep.subr.mxu0 0.0
    %408 = vmatpush1.msra.mxu0 0.0
    %409 = vmatprep.subr.mxu0 0.0
    %410 = vmatpush1.msra.mxu0 0.0
    %411 = vmatprep.mubr.f32.mxu0 0.0
    %412 = vmatmul.mubr.f32.gmra.mrb[0].mxu0 %v246
    %v413 = vpop.f32.mrb[0].mxu0
    %v414 = vadd.f32 0.0, %v413
    %v415 = vpop.f32.mrb[0].mxu0
    %416 = vmatprep.mubr.f32.mxu0 0.0
    %417 = vmatmul.mubr.f32.gmra.mrb[0].mxu0 %v249
    %v418 = vpop.f32.mrb[0].mxu0
    %v419 = vadd.f32 0.0, %v418
    %v420 = vpop.f32.mrb[0].mxu0
    %421 = vmatprep.mubr.f32.mxu0 0.0
    %422 = vmatmul.mubr.f32.gmra.mrb[0].mxu0 %v252
    %v423 = vpop.f32.mrb[0].mxu0
    %v424 = vadd.f32 0.0, %v423
    %v425 = vpop.f32.mrb[0].mxu0
    %426 = vmatprep.mubr.f32.mxu0 0.0
    %427 = vmatmul.mubr.f32.gmra.mrb[0].mxu0 %v255
    %v428 = vpop.f32.mrb[0].mxu0
    %v429 = vadd.f32 0.0, %v428
    %v430 = vpop.f32.mrb[0].mxu0
    %431 = vdwg.mxu0
    %s432 = scalar_lea.vmem [#allocation5], 32
    %433 = vst.msk [vmem:[%s432] sm:$0xff] %vm342, %v414
    %434 = vst.msk [vmem:[%s432 + $0x8] sm:$0xff] %vm342, %v419
    %435 = vst.msk [vmem:[%s432 + $0x10] sm:$0xff] %vm342, %v424
    %436 = vst.msk [vmem:[%s432 + $0x18] sm:$0xff] %vm342, %v429
    %437 = vmatprep.subr.mxu0 0.0
    %438 = vmatpush1.msra.mxu0 %v183
    %439 = vmatprep.subr.mxu0 0.0
    %440 = vmatpush1.msra.mxu0 %v188
    %441 = vmatprep.subr.mxu0 0.0
    %442 = vmatpush1.msra.mxu0 0.0
    %443 = vmatprep.subr.mxu0 0.0
    %444 = vmatpush1.msra.mxu0 0.0
    %445 = vmatprep.subr.mxu0 0.0
    %446 = vmatpush1.msra.mxu0 0.0
    %447 = vmatprep.subr.mxu0 0.0
    %448 = vmatpush1.msra.mxu0 0.0
    %449 = vmatprep.subr.mxu0 0.0
    %450 = vmatpush1.msra.mxu0 0.0
    %451 = vmatprep.subr.mxu0 0.0
    %452 = vmatpush1.msra.mxu0 0.0
    %453 = vmatprep.subr.mxu0 0.0
    %454 = vmatpush1.msra.mxu0 0.0
    %455 = vmatprep.subr.mxu0 0.0
    %456 = vmatpush1.msra.mxu0 0.0
    %457 = vmatprep.subr.mxu0 0.0
    %458 = vmatpush1.msra.mxu0 0.0
    %459 = vmatprep.subr.mxu0 0.0
    %460 = vmatpush1.msra.mxu0 0.0
    %461 = vmatprep.subr.mxu0 0.0
    %462 = vmatpush1.msra.mxu0 0.0
    %463 = vmatprep.subr.mxu0 0.0
    %464 = vmatpush1.msra.mxu0 0.0
    %465 = vmatprep.subr.mxu0 0.0
    %466 = vmatpush1.msra.mxu0 0.0
    %467 = vmatprep.subr.mxu0 0.0
    %468 = vmatpush1.msra.mxu0 0.0
    %469 = vmatprep.subr.mxu0 0.0
    %470 = vmatpush1.msra.mxu0 0.0
    %471 = vmatprep.subr.mxu0 0.0
    %472 = vmatpush1.msra.mxu0 0.0
    %473 = vmatprep.subr.mxu0 0.0
    %474 = vmatpush1.msra.mxu0 0.0
    %475 = vmatprep.subr.mxu0 0.0
    %476 = vmatpush1.msra.mxu0 0.0
    %477 = vmatprep.subr.mxu0 0.0
    %478 = vmatpush1.msra.mxu0 0.0
    %479 = vmatprep.subr.mxu0 0.0
    %480 = vmatpush1.msra.mxu0 0.0
    %481 = vmatprep.subr.mxu0 0.0
    %482 = vmatpush1.msra.mxu0 0.0
    %483 = vmatprep.subr.mxu0 0.0
    %484 = vmatpush1.msra.mxu0 0.0
    %485 = vmatprep.subr.mxu0 0.0
    %486 = vmatpush1.msra.mxu0 0.0
    %487 = vmatprep.subr.mxu0 0.0
    %488 = vmatpush1.msra.mxu0 0.0
    %489 = vmatprep.subr.mxu0 0.0
    %490 = vmatpush1.msra.mxu0 0.0
    %491 = vmatprep.subr.mxu0 0.0
    %492 = vmatpush1.msra.mxu0 0.0
    %493 = vmatprep.subr.mxu0 0.0
    %494 = vmatpush1.msra.mxu0 0.0
    %495 = vmatprep.subr.mxu0 0.0
    %496 = vmatpush1.msra.mxu0 0.0
    %497 = vmatprep.subr.mxu0 0.0
    %498 = vmatpush1.msra.mxu0 0.0
    %499 = vmatprep.subr.mxu0 0.0
    %500 = vmatpush1.msra.mxu0 0.0
    %501 = vmatprep.mubr.f32.mxu0 0.0
    %502 = vmatmul.mubr.f32.gmra.mrb[0].mxu0 %v246
    %v503 = vpop.f32.mrb[0].mxu0
    %v504 = vadd.f32 0.0, %v503
    %v505 = vpop.f32.mrb[0].mxu0
    %506 = vmatprep.mubr.f32.mxu0 0.0
    %507 = vmatmul.mubr.f32.gmra.mrb[0].mxu0 %v249
    %v508 = vpop.f32.mrb[0].mxu0
    %v509 = vadd.f32 0.0, %v508
    %v510 = vpop.f32.mrb[0].mxu0
    %511 = vmatprep.mubr.f32.mxu0 0.0
    %512 = vmatmul.mubr.f32.gmra.mrb[0].mxu0 %v252
    %v513 = vpop.f32.mrb[0].mxu0
    %v514 = vadd.f32 0.0, %v513
    %v515 = vpop.f32.mrb[0].mxu0
    %516 = vmatprep.mubr.f32.mxu0 0.0
    %517 = vmatmul.mubr.f32.gmra.mrb[0].mxu0 %v255
    %v518 = vpop.f32.mrb[0].mxu0
    %v519 = vadd.f32 0.0, %v518
    %v520 = vpop.f32.mrb[0].mxu0
    %521 = vdwg.mxu0
    %s522 = scalar_lea.vmem [#allocation5], 64
    %523 = vst.msk [vmem:[%s522] sm:$0xff] %vm342, %v504
    %524 = vst.msk [vmem:[%s522 + $0x8] sm:$0xff] %vm342, %v509
    %525 = vst.msk [vmem:[%s522 + $0x10] sm:$0xff] %vm342, %v514
    %526 = vst.msk [vmem:[%s522 + $0x18] sm:$0xff] %vm342, %v519
    %527 = vmatprep.subr.mxu0 0.0
    %528 = vmatpush1.msra.mxu0 %v193
    %529 = vmatprep.subr.mxu0 0.0
    %530 = vmatpush1.msra.mxu0 %v198
    %531 = vmatprep.subr.mxu0 0.0
    %532 = vmatpush1.msra.mxu0 0.0
    %533 = vmatprep.subr.mxu0 0.0
    %534 = vmatpush1.msra.mxu0 0.0
    %535 = vmatprep.subr.mxu0 0.0
    %536 = vmatpush1.msra.mxu0 0.0
    %537 = vmatprep.subr.mxu0 0.0
    %538 = vmatpush1.msra.mxu0 0.0
    %539 = vmatprep.subr.mxu0 0.0
    %540 = vmatpush1.msra.mxu0 0.0
    %541 = vmatprep.subr.mxu0 0.0
    %542 = vmatpush1.msra.mxu0 0.0
    %543 = vmatprep.subr.mxu0 0.0
    %544 = vmatpush1.msra.mxu0 0.0
    %545 = vmatprep.subr.mxu0 0.0
    %546 = vmatpush1.msra.mxu0 0.0
    %547 = vmatprep.subr.mxu0 0.0
    %548 = vmatpush1.msra.mxu0 0.0
    %549 = vmatprep.subr.mxu0 0.0
    %550 = vmatpush1.msra.mxu0 0.0
    %551 = vmatprep.subr.mxu0 0.0
    %552 = vmatpush1.msra.mxu0 0.0
    %553 = vmatprep.subr.mxu0 0.0
    %554 = vmatpush1.msra.mxu0 0.0
    %555 = vmatprep.subr.mxu0 0.0
    %556 = vmatpush1.msra.mxu0 0.0
    %557 = vmatprep.subr.mxu0 0.0
    %558 = vmatpush1.msra.mxu0 0.0
    %559 = vmatprep.subr.mxu0 0.0
    %560 = vmatpush1.msra.mxu0 0.0
    %561 = vmatprep.subr.mxu0 0.0
    %562 = vmatpush1.msra.mxu0 0.0
    %563 = vmatprep.subr.mxu0 0.0
    %564 = vmatpush1.msra.mxu0 0.0
    %565 = vmatprep.subr.mxu0 0.0
    %566 = vmatpush1.msra.mxu0 0.0
    %567 = vmatprep.subr.mxu0 0.0
    %568 = vmatpush1.msra.mxu0 0.0
    %569 = vmatprep.subr.mxu0 0.0
    %570 = vmatpush1.msra.mxu0 0.0
    %571 = vmatprep.subr.mxu0 0.0
    %572 = vmatpush1.msra.mxu0 0.0
    %573 = vmatprep.subr.mxu0 0.0
    %574 = vmatpush1.msra.mxu0 0.0
    %575 = vmatprep.subr.mxu0 0.0
    %576 = vmatpush1.msra.mxu0 0.0
    %577 = vmatprep.subr.mxu0 0.0
    %578 = vmatpush1.msra.mxu0 0.0
    %579 = vmatprep.subr.mxu0 0.0
    %580 = vmatpush1.msra.mxu0 0.0
    %581 = vmatprep.subr.mxu0 0.0
    %582 = vmatpush1.msra.mxu0 0.0
    %583 = vmatprep.subr.mxu0 0.0
    %584 = vmatpush1.msra.mxu0 0.0
    %585 = vmatprep.subr.mxu0 0.0
    %586 = vmatpush1.msra.mxu0 0.0
    %587 = vmatprep.subr.mxu0 0.0
    %588 = vmatpush1.msra.mxu0 0.0
    %589 = vmatprep.subr.mxu0 0.0
    %590 = vmatpush1.msra.mxu0 0.0
    %591 = vmatprep.mubr.f32.mxu0 0.0
    %592 = vmatmul.mubr.f32.gmra.mrb[0].mxu0 %v246
    %v593 = vpop.f32.mrb[0].mxu0
    %v594 = vadd.f32 0.0, %v593
    %v595 = vpop.f32.mrb[0].mxu0
    %596 = vmatprep.mubr.f32.mxu0 0.0
    %597 = vmatmul.mubr.f32.gmra.mrb[0].mxu0 %v249
    %v598 = vpop.f32.mrb[0].mxu0
    %v599 = vadd.f32 0.0, %v598
    %v600 = vpop.f32.mrb[0].mxu0
    %601 = vmatprep.mubr.f32.mxu0 0.0
    %602 = vmatmul.mubr.f32.gmra.mrb[0].mxu0 %v252
    %v603 = vpop.f32.mrb[0].mxu0
    %v604 = vadd.f32 0.0, %v603
    %v605 = vpop.f32.mrb[0].mxu0
    %606 = vmatprep.mubr.f32.mxu0 0.0
    %607 = vmatmul.mubr.f32.gmra.mrb[0].mxu0 %v255
    %v608 = vpop.f32.mrb[0].mxu0
    %v609 = vadd.f32 0.0, %v608
    %v610 = vpop.f32.mrb[0].mxu0
    %611 = vdwg.mxu0
    %s612 = scalar_lea.vmem [#allocation5], 96
    %613 = vst.msk [vmem:[%s612] sm:$0xff] %vm342, %v594
    %614 = vst.msk [vmem:[%s612 + $0x8] sm:$0xff] %vm342, %v599
    %615 = vst.msk [vmem:[%s612 + $0x10] sm:$0xff] %vm342, %v604
    %616 = vst.msk [vmem:[%s612 + $0x18] sm:$0xff] %vm342, %v609
    %617 = vmatprep.subr.mxu0 0.0
    %618 = vmatpush1.msra.mxu0 %v203
    %619 = vmatprep.subr.mxu0 0.0
    %620 = vmatpush1.msra.mxu0 %v208
    %621 = vmatprep.subr.mxu0 0.0
    %622 = vmatpush1.msra.mxu0 0.0
    %623 = vmatprep.subr.mxu0 0.0
    %624 = vmatpush1.msra.mxu0 0.0
    %625 = vmatprep.subr.mxu0 0.0
    %626 = vmatpush1.msra.mxu0 0.0
    %627 = vmatprep.subr.mxu0 0.0
    %628 = vmatpush1.msra.mxu0 0.0
    %629 = vmatprep.subr.mxu0 0.0
    %630 = vmatpush1.msra.mxu0 0.0
    %631 = vmatprep.subr.mxu0 0.0
    %632 = vmatpush1.msra.mxu0 0.0
    %633 = vmatprep.subr.mxu0 0.0
    %634 = vmatpush1.msra.mxu0 0.0
    %635 = vmatprep.subr.mxu0 0.0
    %636 = vmatpush1.msra.mxu0 0.0
    %637 = vmatprep.subr.mxu0 0.0
    %638 = vmatpush1.msra.mxu0 0.0
    %639 = vmatprep.subr.mxu0 0.0
    %640 = vmatpush1.msra.mxu0 0.0
    %641 = vmatprep.subr.mxu0 0.0
    %642 = vmatpush1.msra.mxu0 0.0
    %643 = vmatprep.subr.mxu0 0.0
    %644 = vmatpush1.msra.mxu0 0.0
    %645 = vmatprep.subr.mxu0 0.0
    %646 = vmatpush1.msra.mxu0 0.0
    %647 = vmatprep.subr.mxu0 0.0
    %648 = vmatpush1.msra.mxu0 0.0
    %649 = vmatprep.subr.mxu0 0.0
    %650 = vmatpush1.msra.mxu0 0.0
    %651 = vmatprep.subr.mxu0 0.0
    %652 = vmatpush1.msra.mxu0 0.0
    %653 = vmatprep.subr.mxu0 0.0
    %654 = vmatpush1.msra.mxu0 0.0
    %655 = vmatprep.subr.mxu0 0.0
    %656 = vmatpush1.msra.mxu0 0.0
    %657 = vmatprep.subr.mxu0 0.0
    %658 = vmatpush1.msra.mxu0 0.0
    %659 = vmatprep.subr.mxu0 0.0
    %660 = vmatpush1.msra.mxu0 0.0
    %661 = vmatprep.subr.mxu0 0.0
    %662 = vmatpush1.msra.mxu0 0.0
    %663 = vmatprep.subr.mxu0 0.0
    %664 = vmatpush1.msra.mxu0 0.0
    %665 = vmatprep.subr.mxu0 0.0
    %666 = vmatpush1.msra.mxu0 0.0
    %667 = vmatprep.subr.mxu0 0.0
    %668 = vmatpush1.msra.mxu0 0.0
    %669 = vmatprep.subr.mxu0 0.0
    %670 = vmatpush1.msra.mxu0 0.0
    %671 = vmatprep.subr.mxu0 0.0
    %672 = vmatpush1.msra.mxu0 0.0
    %673 = vmatprep.subr.mxu0 0.0
    %674 = vmatpush1.msra.mxu0 0.0
    %675 = vmatprep.subr.mxu0 0.0
    %676 = vmatpush1.msra.mxu0 0.0
    %677 = vmatprep.subr.mxu0 0.0
    %678 = vmatpush1.msra.mxu0 0.0
    %679 = vmatprep.subr.mxu0 0.0
    %680 = vmatpush1.msra.mxu0 0.0
    %681 = vmatprep.mubr.f32.mxu0 0.0
    %682 = vmatmul.mubr.f32.gmra.mrb[0].mxu0 %v246
    %v683 = vpop.f32.mrb[0].mxu0
    %v684 = vadd.f32 0.0, %v683
    %v685 = vpop.f32.mrb[0].mxu0
    %686 = vmatprep.mubr.f32.mxu0 0.0
    %687 = vmatmul.mubr.f32.gmra.mrb[0].mxu0 %v249
    %v688 = vpop.f32.mrb[0].mxu0
    %v689 = vadd.f32 0.0, %v688
    %v690 = vpop.f32.mrb[0].mxu0
    %691 = vmatprep.mubr.f32.mxu0 0.0
    %692 = vmatmul.mubr.f32.gmra.mrb[0].mxu0 %v252
    %v693 = vpop.f32.mrb[0].mxu0
    %v694 = vadd.f32 0.0, %v693
    %v695 = vpop.f32.mrb[0].mxu0
    %696 = vmatprep.mubr.f32.mxu0 0.0
    %697 = vmatmul.mubr.f32.gmra.mrb[0].mxu0 %v255
    %v698 = vpop.f32.mrb[0].mxu0
    %v699 = vadd.f32 0.0, %v698
    %v700 = vpop.f32.mrb[0].mxu0
    %701 = vdwg.mxu0
    %s702 = scalar_lea.vmem [#allocation5], 128
    %703 = vst.msk [vmem:[%s702] sm:$0xff] %vm342, %v684
    %704 = vst.msk [vmem:[%s702 + $0x8] sm:$0xff] %vm342, %v689
    %705 = vst.msk [vmem:[%s702 + $0x10] sm:$0xff] %vm342, %v694
    %706 = vst.msk [vmem:[%s702 + $0x18] sm:$0xff] %vm342, %v699
    %707 = vmatprep.subr.mxu0 0.0
    %708 = vmatpush1.msra.mxu0 %v213
    %709 = vmatprep.subr.mxu0 0.0
    %710 = vmatpush1.msra.mxu0 %v218
    %711 = vmatprep.subr.mxu0 0.0
    %712 = vmatpush1.msra.mxu0 0.0
    %713 = vmatprep.subr.mxu0 0.0
    %714 = vmatpush1.msra.mxu0 0.0
    %715 = vmatprep.subr.mxu0 0.0
    %716 = vmatpush1.msra.mxu0 0.0
    %717 = vmatprep.subr.mxu0 0.0
    %718 = vmatpush1.msra.mxu0 0.0
    %719 = vmatprep.subr.mxu0 0.0
    %720 = vmatpush1.msra.mxu0 0.0
    %721 = vmatprep.subr.mxu0 0.0
    %722 = vmatpush1.msra.mxu0 0.0
    %723 = vmatprep.subr.mxu0 0.0
    %724 = vmatpush1.msra.mxu0 0.0
    %725 = vmatprep.subr.mxu0 0.0
    %726 = vmatpush1.msra.mxu0 0.0
    %727 = vmatprep.subr.mxu0 0.0
    %728 = vmatpush1.msra.mxu0 0.0
    %729 = vmatprep.subr.mxu0 0.0
    %730 = vmatpush1.msra.mxu0 0.0
    %731 = vmatprep.subr.mxu0 0.0
    %732 = vmatpush1.msra.mxu0 0.0
    %733 = vmatprep.subr.mxu0 0.0
    %734 = vmatpush1.msra.mxu0 0.0
    %735 = vmatprep.subr.mxu0 0.0
    %736 = vmatpush1.msra.mxu0 0.0
    %737 = vmatprep.subr.mxu0 0.0
    %738 = vmatpush1.msra.mxu0 0.0
    %739 = vmatprep.subr.mxu0 0.0
    %740 = vmatpush1.msra.mxu0 0.0
    %741 = vmatprep.subr.mxu0 0.0
    %742 = vmatpush1.msra.mxu0 0.0
    %743 = vmatprep.subr.mxu0 0.0
    %744 = vmatpush1.msra.mxu0 0.0
    %745 = vmatprep.subr.mxu0 0.0
    %746 = vmatpush1.msra.mxu0 0.0
    %747 = vmatprep.subr.mxu0 0.0
    %748 = vmatpush1.msra.mxu0 0.0
    %749 = vmatprep.subr.mxu0 0.0
    %750 = vmatpush1.msra.mxu0 0.0
    %751 = vmatprep.subr.mxu0 0.0
    %752 = vmatpush1.msra.mxu0 0.0
    %753 = vmatprep.subr.mxu0 0.0
    %754 = vmatpush1.msra.mxu0 0.0
    %755 = vmatprep.subr.mxu0 0.0
    %756 = vmatpush1.msra.mxu0 0.0
    %757 = vmatprep.subr.mxu0 0.0
    %758 = vmatpush1.msra.mxu0 0.0
    %759 = vmatprep.subr.mxu0 0.0
    %760 = vmatpush1.msra.mxu0 0.0
    %761 = vmatprep.subr.mxu0 0.0
    %762 = vmatpush1.msra.mxu0 0.0
    %763 = vmatprep.subr.mxu0 0.0
    %764 = vmatpush1.msra.mxu0 0.0
    %765 = vmatprep.subr.mxu0 0.0
    %766 = vmatpush1.msra.mxu0 0.0
    %767 = vmatprep.subr.mxu0 0.0
    %768 = vmatpush1.msra.mxu0 0.0
    %769 = vmatprep.subr.mxu0 0.0
    %770 = vmatpush1.msra.mxu0 0.0
    %771 = vmatprep.mubr.f32.mxu0 0.0
    %772 = vmatmul.mubr.f32.gmra.mrb[0].mxu0 %v246
    %v773 = vpop.f32.mrb[0].mxu0
    %v774 = vadd.f32 0.0, %v773
    %v775 = vpop.f32.mrb[0].mxu0
    %776 = vmatprep.mubr.f32.mxu0 0.0
    %777 = vmatmul.mubr.f32.gmra.mrb[0].mxu0 %v249
    %v778 = vpop.f32.mrb[0].mxu0
    %v779 = vadd.f32 0.0, %v778
    %v780 = vpop.f32.mrb[0].mxu0
    %781 = vmatprep.mubr.f32.mxu0 0.0
    %782 = vmatmul.mubr.f32.gmra.mrb[0].mxu0 %v252
    %v783 = vpop.f32.mrb[0].mxu0
    %v784 = vadd.f32 0.0, %v783
    %v785 = vpop.f32.mrb[0].mxu0
    %786 = vmatprep.mubr.f32.mxu0 0.0
    %787 = vmatmul.mubr.f32.gmra.mrb[0].mxu0 %v255
    %v788 = vpop.f32.mrb[0].mxu0
    %v789 = vadd.f32 0.0, %v788
    %v790 = vpop.f32.mrb[0].mxu0
    %791 = vdwg.mxu0
    %s792 = scalar_lea.vmem [#allocation5], 160
    %793 = vst.msk [vmem:[%s792] sm:$0xff] %vm342, %v774
    %794 = vst.msk [vmem:[%s792 + $0x8] sm:$0xff] %vm342, %v779
    %795 = vst.msk [vmem:[%s792 + $0x10] sm:$0xff] %vm342, %v784
    %796 = vst.msk [vmem:[%s792 + $0x18] sm:$0xff] %vm342, %v789
    %797 = vmatprep.subr.mxu0 0.0
    %798 = vmatpush1.msra.mxu0 %v223
    %799 = vmatprep.subr.mxu0 0.0
    %800 = vmatpush1.msra.mxu0 %v228
    %801 = vmatprep.subr.mxu0 0.0
    %802 = vmatpush1.msra.mxu0 0.0
    %803 = vmatprep.subr.mxu0 0.0
    %804 = vmatpush1.msra.mxu0 0.0
    %805 = vmatprep.subr.mxu0 0.0
    %806 = vmatpush1.msra.mxu0 0.0
    %807 = vmatprep.subr.mxu0 0.0
    %808 = vmatpush1.msra.mxu0 0.0
    %809 = vmatprep.subr.mxu0 0.0
    %810 = vmatpush1.msra.mxu0 0.0
    %811 = vmatprep.subr.mxu0 0.0
    %812 = vmatpush1.msra.mxu0 0.0
    %813 = vmatprep.subr.mxu0 0.0
    %814 = vmatpush1.msra.mxu0 0.0
    %815 = vmatprep.subr.mxu0 0.0
    %816 = vmatpush1.msra.mxu0 0.0
    %817 = vmatprep.subr.mxu0 0.0
    %818 = vmatpush1.msra.mxu0 0.0
    %819 = vmatprep.subr.mxu0 0.0
    %820 = vmatpush1.msra.mxu0 0.0
    %821 = vmatprep.subr.mxu0 0.0
    %822 = vmatpush1.msra.mxu0 0.0
    %823 = vmatprep.subr.mxu0 0.0
    %824 = vmatpush1.msra.mxu0 0.0
    %825 = vmatprep.subr.mxu0 0.0
    %826 = vmatpush1.msra.mxu0 0.0
    %827 = vmatprep.subr.mxu0 0.0
    %828 = vmatpush1.msra.mxu0 0.0
    %829 = vmatprep.subr.mxu0 0.0
    %830 = vmatpush1.msra.mxu0 0.0
    %831 = vmatprep.subr.mxu0 0.0
    %832 = vmatpush1.msra.mxu0 0.0
    %833 = vmatprep.subr.mxu0 0.0
    %834 = vmatpush1.msra.mxu0 0.0
    %835 = vmatprep.subr.mxu0 0.0
    %836 = vmatpush1.msra.mxu0 0.0
    %837 = vmatprep.subr.mxu0 0.0
    %838 = vmatpush1.msra.mxu0 0.0
    %839 = vmatprep.subr.mxu0 0.0
    %840 = vmatpush1.msra.mxu0 0.0
    %841 = vmatprep.subr.mxu0 0.0
    %842 = vmatpush1.msra.mxu0 0.0
    %843 = vmatprep.subr.mxu0 0.0
    %844 = vmatpush1.msra.mxu0 0.0
    %845 = vmatprep.subr.mxu0 0.0
    %846 = vmatpush1.msra.mxu0 0.0
    %847 = vmatprep.subr.mxu0 0.0
    %848 = vmatpush1.msra.mxu0 0.0
    %849 = vmatprep.subr.mxu0 0.0
    %850 = vmatpush1.msra.mxu0 0.0
    %851 = vmatprep.subr.mxu0 0.0
    %852 = vmatpush1.msra.mxu0 0.0
    %853 = vmatprep.subr.mxu0 0.0
    %854 = vmatpush1.msra.mxu0 0.0
    %855 = vmatprep.subr.mxu0 0.0
    %856 = vmatpush1.msra.mxu0 0.0
    %857 = vmatprep.subr.mxu0 0.0
    %858 = vmatpush1.msra.mxu0 0.0
    %859 = vmatprep.subr.mxu0 0.0
    %860 = vmatpush1.msra.mxu0 0.0
    %861 = vmatprep.mubr.f32.mxu0 0.0
    %862 = vmatmul.mubr.f32.gmra.mrb[0].mxu0 %v246
    %v863 = vpop.f32.mrb[0].mxu0
    %v864 = vadd.f32 0.0, %v863
    %v865 = vpop.f32.mrb[0].mxu0
    %866 = vmatprep.mubr.f32.mxu0 0.0
    %867 = vmatmul.mubr.f32.gmra.mrb[0].mxu0 %v249
    %v868 = vpop.f32.mrb[0].mxu0
    %v869 = vadd.f32 0.0, %v868
    %v870 = vpop.f32.mrb[0].mxu0
    %871 = vmatprep.mubr.f32.mxu0 0.0
    %872 = vmatmul.mubr.f32.gmra.mrb[0].mxu0 %v252
    %v873 = vpop.f32.mrb[0].mxu0
    %v874 = vadd.f32 0.0, %v873
    %v875 = vpop.f32.mrb[0].mxu0
    %876 = vmatprep.mubr.f32.mxu0 0.0
    %877 = vmatmul.mubr.f32.gmra.mrb[0].mxu0 %v255
    %v878 = vpop.f32.mrb[0].mxu0
    %v879 = vadd.f32 0.0, %v878
    %v880 = vpop.f32.mrb[0].mxu0
    %881 = vdwg.mxu0
    %s882 = scalar_lea.vmem [#allocation5], 192
    %883 = vst.msk [vmem:[%s882] sm:$0xff] %vm342, %v864
    %884 = vst.msk [vmem:[%s882 + $0x8] sm:$0xff] %vm342, %v869
    %885 = vst.msk [vmem:[%s882 + $0x10] sm:$0xff] %vm342, %v874
    %886 = vst.msk [vmem:[%s882 + $0x18] sm:$0xff] %vm342, %v879
    %887 = vmatprep.subr.mxu0 0.0
    %888 = vmatpush1.msra.mxu0 %v233
    %889 = vmatprep.subr.mxu0 0.0
    %890 = vmatpush1.msra.mxu0 %v238
    %891 = vmatprep.subr.mxu0 0.0
    %892 = vmatpush1.msra.mxu0 0.0
    %893 = vmatprep.subr.mxu0 0.0
    %894 = vmatpush1.msra.mxu0 0.0
    %895 = vmatprep.subr.mxu0 0.0
    %896 = vmatpush1.msra.mxu0 0.0
    %897 = vmatprep.subr.mxu0 0.0
    %898 = vmatpush1.msra.mxu0 0.0
    %899 = vmatprep.subr.mxu0 0.0
    %900 = vmatpush1.msra.mxu0 0.0
    %901 = vmatprep.subr.mxu0 0.0
    %902 = vmatpush1.msra.mxu0 0.0
    %903 = vmatprep.subr.mxu0 0.0
    %904 = vmatpush1.msra.mxu0 0.0
    %905 = vmatprep.subr.mxu0 0.0
    %906 = vmatpush1.msra.mxu0 0.0
    %907 = vmatprep.subr.mxu0 0.0
    %908 = vmatpush1.msra.mxu0 0.0
    %909 = vmatprep.subr.mxu0 0.0
    %910 = vmatpush1.msra.mxu0 0.0
    %911 = vmatprep.subr.mxu0 0.0
    %912 = vmatpush1.msra.mxu0 0.0
    %913 = vmatprep.subr.mxu0 0.0
    %914 = vmatpush1.msra.mxu0 0.0
    %915 = vmatprep.subr.mxu0 0.0
    %916 = vmatpush1.msra.mxu0 0.0
    %917 = vmatprep.subr.mxu0 0.0
    %918 = vmatpush1.msra.mxu0 0.0
    %919 = vmatprep.subr.mxu0 0.0
    %920 = vmatpush1.msra.mxu0 0.0
    %921 = vmatprep.subr.mxu0 0.0
    %922 = vmatpush1.msra.mxu0 0.0
    %923 = vmatprep.subr.mxu0 0.0
    %924 = vmatpush1.msra.mxu0 0.0
    %925 = vmatprep.subr.mxu0 0.0
    %926 = vmatpush1.msra.mxu0 0.0
    %927 = vmatprep.subr.mxu0 0.0
    %928 = vmatpush1.msra.mxu0 0.0
    %929 = vmatprep.subr.mxu0 0.0
    %930 = vmatpush1.msra.mxu0 0.0
    %931 = vmatprep.subr.mxu0 0.0
    %932 = vmatpush1.msra.mxu0 0.0
    %933 = vmatprep.subr.mxu0 0.0
    %934 = vmatpush1.msra.mxu0 0.0
    %935 = vmatprep.subr.mxu0 0.0
    %936 = vmatpush1.msra.mxu0 0.0
    %937 = vmatprep.subr.mxu0 0.0
    %938 = vmatpush1.msra.mxu0 0.0
    %939 = vmatprep.subr.mxu0 0.0
    %940 = vmatpush1.msra.mxu0 0.0
    %941 = vmatprep.subr.mxu0 0.0
    %942 = vmatpush1.msra.mxu0 0.0
    %943 = vmatprep.subr.mxu0 0.0
    %944 = vmatpush1.msra.mxu0 0.0
    %945 = vmatprep.subr.mxu0 0.0
    %946 = vmatpush1.msra.mxu0 0.0
    %947 = vmatprep.subr.mxu0 0.0
    %948 = vmatpush1.msra.mxu0 0.0
    %949 = vmatprep.subr.mxu0 0.0
    %950 = vmatpush1.msra.mxu0 0.0
    %951 = vmatprep.mubr.f32.mxu0 0.0
    %952 = vmatmul.mubr.f32.gmra.mrb[0].mxu0 %v246
    %v953 = vpop.f32.mrb[0].mxu0
    %v954 = vadd.f32 0.0, %v953
    %v955 = vpop.f32.mrb[0].mxu0
    %956 = vmatprep.mubr.f32.mxu0 0.0
    %957 = vmatmul.mubr.f32.gmra.mrb[0].mxu0 %v249
    %v958 = vpop.f32.mrb[0].mxu0
    %v959 = vadd.f32 0.0, %v958
    %v960 = vpop.f32.mrb[0].mxu0
    %961 = vmatprep.mubr.f32.mxu0 0.0
    %962 = vmatmul.mubr.f32.gmra.mrb[0].mxu0 %v252
    %v963 = vpop.f32.mrb[0].mxu0
    %v964 = vadd.f32 0.0, %v963
    %v965 = vpop.f32.mrb[0].mxu0
    %966 = vmatprep.mubr.f32.mxu0 0.0
    %967 = vmatmul.mubr.f32.gmra.mrb[0].mxu0 %v255
    %v968 = vpop.f32.mrb[0].mxu0
    %v969 = vadd.f32 0.0, %v968
    %v970 = vpop.f32.mrb[0].mxu0
    %971 = vdwg.mxu0
    %s972 = scalar_lea.vmem [#allocation5], 224
    %973 = vst.msk [vmem:[%s972] sm:$0xff] %vm342, %v954
    %974 = vst.msk [vmem:[%s972 + $0x8] sm:$0xff] %vm342, %v959
    %975 = vst.msk [vmem:[%s972 + $0x10] sm:$0xff] %vm342, %v964
    %976 = vst.msk [vmem:[%s972 + $0x18] sm:$0xff] %vm342, %v969
    // Predicated region
    $region18: #{tpu_custom_call.1} parent=1 // pred_check
      _
    $region19: #{tpu_custom_call.1} parent=1 // pred_check_branch
      %978 = sbr.rel (0) target = $region21
    $region20: #{tpu_custom_call.1} parent=1 // pred_region
      %s980 = ssub.s32 4096, 4096
      %981 = vsyncadd [#allocation4], %s980
      %s982 = sshll.u32 [#allocation5], 4
      %s983 = int_to_ptr.vmem [resolvable:$true] %s982
      %988 = dma.vmem_to_hbm [thread:$0]  %s983, 4096, %s3, [#allocation4], 128, 128, 8
    $region21: #{tpu_custom_call.1} parent=1 // pred_fallthru
      _
    // Predicated region
    $region22: #{tpu_custom_call.1} parent=1 // pred_check
      _
    $region23: #{tpu_custom_call.1} parent=1 // pred_check_branch
      %990 = sbr.rel (0) target = $region25
    $region24: #{tpu_custom_call.1} parent=1 // pred_region
      %991 = dma.done [#allocation4], 4096
    $region25: #{tpu_custom_call.1} parent=1 // pred_fallthru
      _
    %992 = vsyncpa [#allocation3], 1
    %993 = vsyncpa [#allocation4], 1

</llo_original>
